<compile_context>
chip_gen: v7x
topology: tpu7x:2x2x1
jax: 0.10.0
libtpu: 0.0.40
codegen_flags: <defaults>
</compile_context>

<pallas_src>
from functools import partial

import jax
import jax.numpy as jnp
import numpy as np
from jax import lax
from jax.experimental import pallas as pl
from jax.experimental.pallas import tpu as pltpu

EPS = 1e-5  # nn.BatchNorm2d default eps


# ----------------------------------------------------------------------------
# Fused kernel
# ----------------------------------------------------------------------------
def _basic_block_kernel(x_ref, w1_ref, g1_ref, b1_ref,
                        w2_ref, g2_ref, b2_ref, out_ref, *, channels):
    """Fused conv3x3+BN+ReLU -> conv3x3+BN+residual+ReLU.

    x_ref   : (B, H, W*C)   NHWC input with (W, C) flattened onto the lanes.
    w*_ref  : (3, W*C, W*C) bf16 per-row-tap banded conv weights.
    g*_ref  : (1, W*C)      BN gamma, tiled per channel across the W groups.
    b*_ref  : (1, W*C)      BN beta, same tiling.
    out_ref : (B*H, W*C)    lane-dense f32 output.
    """
    B, H, WC = x_ref.shape
    C = channels
    inv_n = 1.0 / (B * H * (WC // C))          # per-channel count = N*H*W

    x = x_ref[...]                              # (B, H, WC) f32, lane-dense

    def conv3x3(v, w_ref):
        # v: (B, H, WC) f32.  Three accumulated per-row-tap MXU matmuls; the
        # banded weight absorbs the kw taps + width zero padding, so no
        # (B*H, 3*WC) patches buffer is ever built.  Row halo via aligned
        # 8-row zero pads; the shifted windows are the inherent halo cost.
        zrows = jnp.zeros((B, 8, WC), jnp.float32)
        vr = jnp.concatenate([zrows, v, zrows], axis=1)      # (B, H+16, WC)
        taps = [vr[:, kh + 7:kh + 7 + H, :].reshape(B * H, WC)
                  .astype(jnp.bfloat16) for kh in range(3)]
        acc = jnp.dot(taps[0], w_ref[0], preferred_element_type=jnp.float32)
        acc = acc + jnp.dot(taps[1], w_ref[1], preferred_element_type=jnp.float32)
        acc = acc + jnp.dot(taps[2], w_ref[2], preferred_element_type=jnp.float32)
        return acc                                           # (B*H, WC) f32

    def lane_channel_sum(row_vec):
        # row_vec: (1, WC).  Cyclic roll-and-add tree over the W lane groups
        # of period C; result holds each channel's total replicated across all
        # of its W lanes (direction-agnostic, requires W a power of two).
        s = row_vec
        shift = C
        while shift < WC:
            s = s + pltpu.roll(s, shift, axis=1)
            shift *= 2
        return s

    def batchnorm(acc, gamma, beta):
        # Training-mode batch stats over (N, H, W) per channel, biased
        # variance, eps inside the rsqrt (nn.BatchNorm2d defaults).  All f32.
        mean = lane_channel_sum(jnp.sum(acc, axis=0, keepdims=True)) * inv_n
        centered = acc - mean
        var = lane_channel_sum(
            jnp.sum(centered * centered, axis=0, keepdims=True)) * inv_n
        return centered * lax.rsqrt(var + EPS) * gamma + beta

    # Stage 1: conv1 -> bn1 -> relu (intermediate never leaves VMEM).
    y1 = jnp.maximum(
        batchnorm(conv3x3(x, w1_ref), g1_ref[...], b1_ref[...]), 0.0)

    # Stage 2: conv2 -> bn2 -> + residual -> relu (dense 128-lane store).
    y2 = batchnorm(conv3x3(y1.reshape(B, H, WC), w2_ref),
                   g2_ref[...], b2_ref[...])
    out_ref[...] = jnp.maximum(y2 + x.reshape(B * H, WC), 0.0)


# ----------------------------------------------------------------------------
# Parameter preparation (host-side, once)
# ----------------------------------------------------------------------------
def _banded_tap_weights(w_oihw, W):
    """(Cout, Cin, 3, 3) torch layout -> (3, W*Cin, W*Cout) bf16 per-tap bands.

    For tap kh: row u*Cin + ci (u = input column), col w*Cout + co (w = output
    column), entry = weight[co, ci, kh, u - w + 1] if |u - w| <= 1 else 0.
    The zero band edges implement the width-direction SAME padding.
    """
    w = np.asarray(w_oihw, np.float32)            # (Cout, Cin, 3, 3)
    Cout, Cin = w.shape[:2]
    A = np.zeros((3, W, Cin, W, Cout), np.float32)
    for kh in range(3):
        for kw in range(3):
            for wo in range(W):                   # output column
                wi = wo + kw - 1                  # input column
                if 0 <= wi < W:
                    A[kh, wi, :, wo, :] = w[:, :, kh, kw].T
    return jnp.asarray(A.reshape(3, W * Cin, W * Cout), dtype=jnp.bfloat16)


def make_basic_block_params(w1_oihw, g1, b1, w2_oihw, g2, b2, W):
    C = int(w1_oihw.shape[0])
    assert W * C == 128, "lane-dense layout assumes W*C == 128"
    assert (W & (W - 1)) == 0, "roll-tree reduction assumes W is a power of two"

    def tile_channel(v):          # (C,) -> (1, W*C), lane w*C + c -> v[c]
        return jnp.tile(v.astype(jnp.float32), W).reshape(1, W * C)

    return {
        "w1": _banded_tap_weights(w1_oihw, W),
        "w2": _banded_tap_weights(w2_oihw, W),
        "g1": tile_channel(g1), "b1": tile_channel(b1),
        "g2": tile_channel(g2), "b2": tile_channel(b2),
    }


# ----------------------------------------------------------------------------
# Forward wrapper
# ----------------------------------------------------------------------------
@jax.jit
def basic_block_forward(x_nchw, params):
    """BasicBlock forward. x_nchw: (B, C, H, W) float32."""
    B, C, H, W = x_nchw.shape
    # NCHW -> NHWC -> (B, H, W*C): width+channels share the 128-wide lane axis.
    x_flat = jnp.transpose(x_nchw, (0, 2, 3, 1)).reshape(B, H, W * C)

    vmem = pl.BlockSpec(memory_space=pltpu.MemorySpace.VMEM)
    out = pl.pallas_call(
        partial(_basic_block_kernel, channels=C),
        out_shape=jax.ShapeDtypeStruct((B * H, W * C), jnp.float32),
        in_specs=[vmem] * 7,
        out_specs=vmem,
    )(x_flat, params["w1"], params["g1"], params["b1"],
      params["w2"], params["g2"], params["b2"])

    return jnp.transpose(out.reshape(B, H, W, C), (0, 3, 1, 2))   # back to NCHW


# ----------------------------------------------------------------------------
# Pure-JAX reference (for correctness check)
# ----------------------------------------------------------------------------
def _ref_conv3x3(x_nhwc, w_hwio):
    return lax.conv_general_dilated(
        x_nhwc, w_hwio, window_strides=(1, 1), padding="SAME",
        dimension_numbers=("NHWC", "HWIO", "NHWC"))


def _ref_bn(x_nhwc, gamma, beta):
    mean = jnp.mean(x_nhwc, axis=(0, 1, 2), keepdims=True)
    var = jnp.mean((x_nhwc - mean) ** 2, axis=(0, 1, 2), keepdims=True)
    return (x_nhwc - mean) * lax.rsqrt(var + EPS) * gamma + beta


def basic_block_reference(x_nchw, w1_hwio, g1, b1, w2_hwio, g2, b2):
    x = jnp.transpose(x_nchw, (0, 2, 3, 1))
    out = jnp.maximum(_ref_bn(_ref_conv3x3(x, w1_hwio), g1, b1), 0.0)
    out = _ref_bn(_ref_conv3x3(out, w2_hwio), g2, b2) + x
    out = jnp.maximum(out, 0.0)
    return jnp.transpose(out, (0, 3, 1, 2))


# ----------------------------------------------------------------------------
# Main
# ----------------------------------------------------------------------------
if __name__ == "__main__":
    B, C, H, W = 2, 8, 16, 16      # in_planes == planes == 8, stride == 1; W*C == 128
    key = jax.random.PRNGKey(0)
    kx, kw1, kw2, kg1, kb1, kg2, kb2 = jax.random.split(key, 7)

    x = jax.random.normal(kx, (B, C, H, W), jnp.float32)

    # Conv weights in PyTorch layout (Cout, Cin, kH, kW), kaiming-ish scale.
    fan_in = C * 3 * 3
    w1_oihw = jax.random.normal(kw1, (C, C, 3, 3), jnp.float32) * np.sqrt(2.0 / fan_in)
    w2_oihw = jax.random.normal(kw2, (C, C, 3, 3), jnp.float32) * np.sqrt(2.0 / fan_in)

    # BN affine params (deterministic, non-trivial).
    g1 = 1.0 + 0.1 * jax.random.normal(kg1, (C,), jnp.float32)
    b1 = 0.1 * jax.random.normal(kb1, (C,), jnp.float32)
    g2 = 1.0 + 0.1 * jax.random.normal(kg2, (C,), jnp.float32)
    b2 = 0.1 * jax.random.normal(kb2, (C,), jnp.float32)

    params = make_basic_block_params(w1_oihw, g1, b1, w2_oihw, g2, b2, W)

    out = jax.block_until_ready(basic_block_forward(x, params))

    # Sanity check against a pure-JAX f32 reference.  Tolerance loosened vs.
    # the f32 kernel because the conv MXU operands are now bf16 (f32 accum).
    w1_hwio = jnp.transpose(w1_oihw, (2, 3, 1, 0))
    w2_hwio = jnp.transpose(w2_oihw, (2, 3, 1, 0))
    ref = jax.block_until_ready(
        basic_block_reference(x, w1_hwio, g1, b1, w2_hwio, g2, b2))

    np.testing.assert_allclose(np.asarray(out), np.asarray(ref),
                               rtol=5e-2, atol=5e-2)
    print("KERNEL_OK")
</pallas_src>

<mosaic_0001>
module attributes {stable_mosaic.version = 11 : i64} {
  func.func @_basic_block_kernel(%arg0: memref<2x16x128xf32, #tpu.memory_space<vmem>>, %arg1: memref<3x128x128xbf16, #tpu.memory_space<vmem>>, %arg2: memref<1x128xf32, #tpu.memory_space<vmem>>, %arg3: memref<1x128xf32, #tpu.memory_space<vmem>>, %arg4: memref<3x128x128xbf16, #tpu.memory_space<vmem>>, %arg5: memref<1x128xf32, #tpu.memory_space<vmem>>, %arg6: memref<1x128xf32, #tpu.memory_space<vmem>>, %arg7: memref<32x128xf32, #tpu.memory_space<vmem>>) attributes {dimension_semantics = [], scalar_prefetch = 0 : i64, scratch_operands = 0 : i64, tpu.core_type = #tpu.core_type<tc>} {
    %c0 = arith.constant 0 : index
    %c0_0 = arith.constant 0 : index
    %c0_1 = arith.constant 0 : index
    %0 = vector.load %arg0[%c0, %c0_0, %c0_1] : memref<2x16x128xf32, #tpu.memory_space<vmem>>, vector<2x16x128xf32>
    %cst = arith.constant 0.000000e+00 : f32
    %1 = vector.broadcast %cst : f32 to vector<2x8x128xf32>
    %2 = tpu.concatenate %1, %0, %1 in 1 : vector<2x8x128xf32>, vector<2x16x128xf32>, vector<2x8x128xf32> -> vector<2x32x128xf32>
    %3 = vector.extract_strided_slice %2 {offsets = [0, 7, 0], sizes = [2, 16, 128], strides = [1, 1, 1]} : vector<2x32x128xf32> to vector<2x16x128xf32>
    %4 = vector.shape_cast %3 : vector<2x16x128xf32> to vector<32x128xf32>
    %5 = arith.truncf %4 : vector<32x128xf32> to vector<32x128xbf16>
    %6 = vector.extract_strided_slice %2 {offsets = [0, 8, 0], sizes = [2, 16, 128], strides = [1, 1, 1]} : vector<2x32x128xf32> to vector<2x16x128xf32>
    %7 = vector.shape_cast %6 : vector<2x16x128xf32> to vector<32x128xf32>
    %8 = arith.truncf %7 : vector<32x128xf32> to vector<32x128xbf16>
    %9 = vector.extract_strided_slice %2 {offsets = [0, 9, 0], sizes = [2, 16, 128], strides = [1, 1, 1]} : vector<2x32x128xf32> to vector<2x16x128xf32>
    %10 = vector.shape_cast %9 : vector<2x16x128xf32> to vector<32x128xf32>
    %11 = arith.truncf %10 : vector<32x128xf32> to vector<32x128xbf16>
    %c0_2 = arith.constant 0 : index
    %c0_3 = arith.constant 0 : index
    %c0_4 = arith.constant 0 : index
    %12 = vector.load %arg1[%c0_2, %c0_3, %c0_4] : memref<3x128x128xbf16, #tpu.memory_space<vmem>>, vector<1x128x128xbf16>
    %13 = vector.shape_cast %12 : vector<1x128x128xbf16> to vector<128x128xbf16>
    %cst_5 = arith.constant dense<0.000000e+00> : vector<32x128xf32>
    %14 = tpu.matmul %5, %13, %cst_5 {dimension_numbers = #tpu.dot_dimension_numbers<[1], [0], [0], [1], [0, 0, 1, 1], [], []>} : vector<32x128xbf16>, vector<128x128xbf16>, vector<32x128xf32> -> vector<32x128xf32>
    %c1 = arith.constant 1 : index
    %c0_6 = arith.constant 0 : index
    %c0_7 = arith.constant 0 : index
    %15 = vector.load %arg1[%c1, %c0_6, %c0_7] : memref<3x128x128xbf16, #tpu.memory_space<vmem>>, vector<1x128x128xbf16>
    %16 = vector.shape_cast %15 : vector<1x128x128xbf16> to vector<128x128xbf16>
    %cst_8 = arith.constant dense<0.000000e+00> : vector<32x128xf32>
    %17 = tpu.matmul %8, %16, %cst_8 {dimension_numbers = #tpu.dot_dimension_numbers<[1], [0], [0], [1], [0, 0, 1, 1], [], []>} : vector<32x128xbf16>, vector<128x128xbf16>, vector<32x128xf32> -> vector<32x128xf32>
    %18 = arith.addf %14, %17 : vector<32x128xf32>
    %c2 = arith.constant 2 : index
    %c0_9 = arith.constant 0 : index
    %c0_10 = arith.constant 0 : index
    %19 = vector.load %arg1[%c2, %c0_9, %c0_10] : memref<3x128x128xbf16, #tpu.memory_space<vmem>>, vector<1x128x128xbf16>
    %20 = vector.shape_cast %19 : vector<1x128x128xbf16> to vector<128x128xbf16>
    %cst_11 = arith.constant dense<0.000000e+00> : vector<32x128xf32>
    %21 = tpu.matmul %11, %20, %cst_11 {dimension_numbers = #tpu.dot_dimension_numbers<[1], [0], [0], [1], [0, 0, 1, 1], [], []>} : vector<32x128xbf16>, vector<128x128xbf16>, vector<32x128xf32> -> vector<32x128xf32>
    %22 = arith.addf %18, %21 : vector<32x128xf32>
    %c0_12 = arith.constant 0 : index
    %c0_13 = arith.constant 0 : index
    %23 = vector.load %arg2[%c0_12, %c0_13] : memref<1x128xf32, #tpu.memory_space<vmem>>, vector<1x128xf32>
    %c0_14 = arith.constant 0 : index
    %c0_15 = arith.constant 0 : index
    %24 = vector.load %arg3[%c0_14, %c0_15] : memref<1x128xf32, #tpu.memory_space<vmem>>, vector<1x128xf32>
    %cst_16 = arith.constant dense<0.000000e+00> : vector<128xf32>
    %25 = vector.multi_reduction <add>, %22, %cst_16 [0] : vector<32x128xf32> to vector<128xf32>
    %26 = vector.shape_cast %25 : vector<128xf32> to vector<1x128xf32>
    %c8_i32 = arith.constant 8 : i32
    %27 = tpu.dynamic_rotate %26 by %c8_i32 dim 1 : vector<1x128xf32>, i32 -> vector<1x128xf32>
    %28 = arith.addf %26, %27 : vector<1x128xf32>
    %c16_i32 = arith.constant 16 : i32
    %29 = tpu.dynamic_rotate %28 by %c16_i32 dim 1 : vector<1x128xf32>, i32 -> vector<1x128xf32>
    %30 = arith.addf %28, %29 : vector<1x128xf32>
    %c32_i32 = arith.constant 32 : i32
    %31 = tpu.dynamic_rotate %30 by %c32_i32 dim 1 : vector<1x128xf32>, i32 -> vector<1x128xf32>
    %32 = arith.addf %30, %31 : vector<1x128xf32>
    %c64_i32 = arith.constant 64 : i32
    %33 = tpu.dynamic_rotate %32 by %c64_i32 dim 1 : vector<1x128xf32>, i32 -> vector<1x128xf32>
    %34 = arith.addf %32, %33 : vector<1x128xf32>
    %cst_17 = arith.constant 0.001953125 : f32
    %35 = vector.broadcast %cst_17 : f32 to vector<1x128xf32>
    %36 = arith.mulf %34, %35 : vector<1x128xf32>
    %37 = vector.broadcast %36 : vector<1x128xf32> to vector<32x128xf32>
    %38 = arith.subf %22, %37 : vector<32x128xf32>
    %39 = arith.mulf %38, %38 : vector<32x128xf32>
    %cst_18 = arith.constant dense<0.000000e+00> : vector<128xf32>
    %40 = vector.multi_reduction <add>, %39, %cst_18 [0] : vector<32x128xf32> to vector<128xf32>
    %41 = vector.shape_cast %40 : vector<128xf32> to vector<1x128xf32>
    %c8_i32_19 = arith.constant 8 : i32
    %42 = tpu.dynamic_rotate %41 by %c8_i32_19 dim 1 : vector<1x128xf32>, i32 -> vector<1x128xf32>
    %43 = arith.addf %41, %42 : vector<1x128xf32>
    %c16_i32_20 = arith.constant 16 : i32
    %44 = tpu.dynamic_rotate %43 by %c16_i32_20 dim 1 : vector<1x128xf32>, i32 -> vector<1x128xf32>
    %45 = arith.addf %43, %44 : vector<1x128xf32>
    %c32_i32_21 = arith.constant 32 : i32
    %46 = tpu.dynamic_rotate %45 by %c32_i32_21 dim 1 : vector<1x128xf32>, i32 -> vector<1x128xf32>
    %47 = arith.addf %45, %46 : vector<1x128xf32>
    %c64_i32_22 = arith.constant 64 : i32
    %48 = tpu.dynamic_rotate %47 by %c64_i32_22 dim 1 : vector<1x128xf32>, i32 -> vector<1x128xf32>
    %49 = arith.addf %47, %48 : vector<1x128xf32>
    %cst_23 = arith.constant 0.001953125 : f32
    %50 = vector.broadcast %cst_23 : f32 to vector<1x128xf32>
    %51 = arith.mulf %49, %50 : vector<1x128xf32>
    %cst_24 = arith.constant 9.99999974E-6 : f32
    %52 = vector.broadcast %cst_24 : f32 to vector<1x128xf32>
    %53 = arith.addf %51, %52 : vector<1x128xf32>
    %54 = math.rsqrt %53 : vector<1x128xf32>
    %55 = vector.broadcast %54 : vector<1x128xf32> to vector<32x128xf32>
    %56 = arith.mulf %38, %55 : vector<32x128xf32>
    %57 = vector.broadcast %23 : vector<1x128xf32> to vector<32x128xf32>
    %58 = arith.mulf %56, %57 : vector<32x128xf32>
    %59 = vector.broadcast %24 : vector<1x128xf32> to vector<32x128xf32>
    %60 = arith.addf %58, %59 : vector<32x128xf32>
    %cst_25 = arith.constant 0.000000e+00 : f32
    %61 = vector.broadcast %cst_25 : f32 to vector<32x128xf32>
    %62 = arith.maximumf %60, %61 : vector<32x128xf32>
    %63 = vector.shape_cast %62 : vector<32x128xf32> to vector<2x16x128xf32>
    %cst_26 = arith.constant 0.000000e+00 : f32
    %64 = vector.broadcast %cst_26 : f32 to vector<2x8x128xf32>
    %65 = tpu.concatenate %64, %63, %64 in 1 : vector<2x8x128xf32>, vector<2x16x128xf32>, vector<2x8x128xf32> -> vector<2x32x128xf32>
    %66 = vector.extract_strided_slice %65 {offsets = [0, 7, 0], sizes = [2, 16, 128], strides = [1, 1, 1]} : vector<2x32x128xf32> to vector<2x16x128xf32>
    %67 = vector.shape_cast %66 : vector<2x16x128xf32> to vector<32x128xf32>
    %68 = arith.truncf %67 : vector<32x128xf32> to vector<32x128xbf16>
    %69 = vector.extract_strided_slice %65 {offsets = [0, 8, 0], sizes = [2, 16, 128], strides = [1, 1, 1]} : vector<2x32x128xf32> to vector<2x16x128xf32>
    %70 = vector.shape_cast %69 : vector<2x16x128xf32> to vector<32x128xf32>
    %71 = arith.truncf %70 : vector<32x128xf32> to vector<32x128xbf16>
    %72 = vector.extract_strided_slice %65 {offsets = [0, 9, 0], sizes = [2, 16, 128], strides = [1, 1, 1]} : vector<2x32x128xf32> to vector<2x16x128xf32>
    %73 = vector.shape_cast %72 : vector<2x16x128xf32> to vector<32x128xf32>
    %74 = arith.truncf %73 : vector<32x128xf32> to vector<32x128xbf16>
    %c0_27 = arith.constant 0 : index
    %c0_28 = arith.constant 0 : index
    %c0_29 = arith.constant 0 : index
    %75 = vector.load %arg4[%c0_27, %c0_28, %c0_29] : memref<3x128x128xbf16, #tpu.memory_space<vmem>>, vector<1x128x128xbf16>
    %76 = vector.shape_cast %75 : vector<1x128x128xbf16> to vector<128x128xbf16>
    %cst_30 = arith.constant dense<0.000000e+00> : vector<32x128xf32>
    %77 = tpu.matmul %68, %76, %cst_30 {dimension_numbers = #tpu.dot_dimension_numbers<[1], [0], [0], [1], [0, 0, 1, 1], [], []>} : vector<32x128xbf16>, vector<128x128xbf16>, vector<32x128xf32> -> vector<32x128xf32>
    %c1_31 = arith.constant 1 : index
    %c0_32 = arith.constant 0 : index
    %c0_33 = arith.constant 0 : index
    %78 = vector.load %arg4[%c1_31, %c0_32, %c0_33] : memref<3x128x128xbf16, #tpu.memory_space<vmem>>, vector<1x128x128xbf16>
    %79 = vector.shape_cast %78 : vector<1x128x128xbf16> to vector<128x128xbf16>
    %cst_34 = arith.constant dense<0.000000e+00> : vector<32x128xf32>
    %80 = tpu.matmul %71, %79, %cst_34 {dimension_numbers = #tpu.dot_dimension_numbers<[1], [0], [0], [1], [0, 0, 1, 1], [], []>} : vector<32x128xbf16>, vector<128x128xbf16>, vector<32x128xf32> -> vector<32x128xf32>
    %81 = arith.addf %77, %80 : vector<32x128xf32>
    %c2_35 = arith.constant 2 : index
    %c0_36 = arith.constant 0 : index
    %c0_37 = arith.constant 0 : index
    %82 = vector.load %arg4[%c2_35, %c0_36, %c0_37] : memref<3x128x128xbf16, #tpu.memory_space<vmem>>, vector<1x128x128xbf16>
    %83 = vector.shape_cast %82 : vector<1x128x128xbf16> to vector<128x128xbf16>
    %cst_38 = arith.constant dense<0.000000e+00> : vector<32x128xf32>
    %84 = tpu.matmul %74, %83, %cst_38 {dimension_numbers = #tpu.dot_dimension_numbers<[1], [0], [0], [1], [0, 0, 1, 1], [], []>} : vector<32x128xbf16>, vector<128x128xbf16>, vector<32x128xf32> -> vector<32x128xf32>
    %85 = arith.addf %81, %84 : vector<32x128xf32>
    %c0_39 = arith.constant 0 : index
    %c0_40 = arith.constant 0 : index
    %86 = vector.load %arg5[%c0_39, %c0_40] : memref<1x128xf32, #tpu.memory_space<vmem>>, vector<1x128xf32>
    %c0_41 = arith.constant 0 : index
    %c0_42 = arith.constant 0 : index
    %87 = vector.load %arg6[%c0_41, %c0_42] : memref<1x128xf32, #tpu.memory_space<vmem>>, vector<1x128xf32>
    %cst_43 = arith.constant dense<0.000000e+00> : vector<128xf32>
    %88 = vector.multi_reduction <add>, %85, %cst_43 [0] : vector<32x128xf32> to vector<128xf32>
    %89 = vector.shape_cast %88 : vector<128xf32> to vector<1x128xf32>
    %c8_i32_44 = arith.constant 8 : i32
    %90 = tpu.dynamic_rotate %89 by %c8_i32_44 dim 1 : vector<1x128xf32>, i32 -> vector<1x128xf32>
    %91 = arith.addf %89, %90 : vector<1x128xf32>
    %c16_i32_45 = arith.constant 16 : i32
    %92 = tpu.dynamic_rotate %91 by %c16_i32_45 dim 1 : vector<1x128xf32>, i32 -> vector<1x128xf32>
    %93 = arith.addf %91, %92 : vector<1x128xf32>
    %c32_i32_46 = arith.constant 32 : i32
    %94 = tpu.dynamic_rotate %93 by %c32_i32_46 dim 1 : vector<1x128xf32>, i32 -> vector<1x128xf32>
    %95 = arith.addf %93, %94 : vector<1x128xf32>
    %c64_i32_47 = arith.constant 64 : i32
    %96 = tpu.dynamic_rotate %95 by %c64_i32_47 dim 1 : vector<1x128xf32>, i32 -> vector<1x128xf32>
    %97 = arith.addf %95, %96 : vector<1x128xf32>
    %cst_48 = arith.constant 0.001953125 : f32
    %98 = vector.broadcast %cst_48 : f32 to vector<1x128xf32>
    %99 = arith.mulf %97, %98 : vector<1x128xf32>
    %100 = vector.broadcast %99 : vector<1x128xf32> to vector<32x128xf32>
    %101 = arith.subf %85, %100 : vector<32x128xf32>
    %102 = arith.mulf %101, %101 : vector<32x128xf32>
    %cst_49 = arith.constant dense<0.000000e+00> : vector<128xf32>
    %103 = vector.multi_reduction <add>, %102, %cst_49 [0] : vector<32x128xf32> to vector<128xf32>
    %104 = vector.shape_cast %103 : vector<128xf32> to vector<1x128xf32>
    %c8_i32_50 = arith.constant 8 : i32
    %105 = tpu.dynamic_rotate %104 by %c8_i32_50 dim 1 : vector<1x128xf32>, i32 -> vector<1x128xf32>
    %106 = arith.addf %104, %105 : vector<1x128xf32>
    %c16_i32_51 = arith.constant 16 : i32
    %107 = tpu.dynamic_rotate %106 by %c16_i32_51 dim 1 : vector<1x128xf32>, i32 -> vector<1x128xf32>
    %108 = arith.addf %106, %107 : vector<1x128xf32>
    %c32_i32_52 = arith.constant 32 : i32
    %109 = tpu.dynamic_rotate %108 by %c32_i32_52 dim 1 : vector<1x128xf32>, i32 -> vector<1x128xf32>
    %110 = arith.addf %108, %109 : vector<1x128xf32>
    %c64_i32_53 = arith.constant 64 : i32
    %111 = tpu.dynamic_rotate %110 by %c64_i32_53 dim 1 : vector<1x128xf32>, i32 -> vector<1x128xf32>
    %112 = arith.addf %110, %111 : vector<1x128xf32>
    %cst_54 = arith.constant 0.001953125 : f32
    %113 = vector.broadcast %cst_54 : f32 to vector<1x128xf32>
    %114 = arith.mulf %112, %113 : vector<1x128xf32>
    %cst_55 = arith.constant 9.99999974E-6 : f32
    %115 = vector.broadcast %cst_55 : f32 to vector<1x128xf32>
    %116 = arith.addf %114, %115 : vector<1x128xf32>
    %117 = math.rsqrt %116 : vector<1x128xf32>
    %118 = vector.broadcast %117 : vector<1x128xf32> to vector<32x128xf32>
    %119 = arith.mulf %101, %118 : vector<32x128xf32>
    %120 = vector.broadcast %86 : vector<1x128xf32> to vector<32x128xf32>
    %121 = arith.mulf %119, %120 : vector<32x128xf32>
    %122 = vector.broadcast %87 : vector<1x128xf32> to vector<32x128xf32>
    %123 = arith.addf %121, %122 : vector<32x128xf32>
    %124 = vector.shape_cast %0 : vector<2x16x128xf32> to vector<32x128xf32>
    %125 = arith.addf %123, %124 : vector<32x128xf32>
    %cst_56 = arith.constant 0.000000e+00 : f32
    %126 = vector.broadcast %cst_56 : f32 to vector<32x128xf32>
    %127 = arith.maximumf %125, %126 : vector<32x128xf32>
    %c0_57 = arith.constant 0 : index
    %c0_58 = arith.constant 0 : index
    %128 = vector.load %arg7[%c0_57, %c0_58] : memref<32x128xf32, #tpu.memory_space<vmem>>, vector<32x128xf32>
    tpu.vector_store %arg7[%c0_57, %c0_58], %127 {strides = array<i32>} : memref<32x128xf32, #tpu.memory_space<vmem>>, vector<32x128xf32>,
    return
  }
}

</mosaic_0001>

<llo_original>
// kernel: basic_block_forward.1
$region0: #{basic_block_forward.1}
  #allocation0 [shape = 'u32[]', space=smem, size = 0x4, offset = 0x4, fixed_abs, tag = 'smem constant byte address 0x4 - core index']
  #allocation1 [shape = 'u32[144,128]{1,0:T(1,128)}', space=vmem, size = 0x12000, scoped, tag = 'internal scratch']
  %s0 = inlined_call_operand.vmem [shape: f32[2,16,128], index: 0, kind: input, shape index: {}]
  %s1 = inlined_call_operand.vmem [shape: bf16[3,128,128], index: 1, kind: input, shape index: {}]
  %s2 = inlined_call_operand.vmem [shape: f32[1,128], index: 2, kind: input, shape index: {}]
  %s3 = inlined_call_operand.vmem [shape: f32[1,128], index: 3, kind: input, shape index: {}]
  %s4 = inlined_call_operand.vmem [shape: bf16[3,128,128], index: 4, kind: input, shape index: {}]
  %s5 = inlined_call_operand.vmem [shape: f32[1,128], index: 5, kind: input, shape index: {}]
  %s6 = inlined_call_operand.vmem [shape: f32[1,128], index: 6, kind: input, shape index: {}]
  %s7 = inlined_call_operand.vmem [shape: f32[32,128], index: 7, kind: output, shape index: {}]
  %s8 = sld [smem:[#allocation0]]
  $region38: #{basic_block_forward.1} parent=0
    _
  %s10 = ssub.s32 1, %s8
  %s11 = scalar_select 0, %s10, %s8
  // Predicated region
  $region2: #{basic_block_forward.1} parent=0 // pred_check
    _
  $region3: #{basic_block_forward.1} parent=0 // pred_check_branch
    %13 = sbr.rel (0) target = $region5
  $region4: #{basic_block_forward.1} parent=0 // pred_region
    _
  $region5: #{basic_block_forward.1} parent=0 // pred_fallthru
    _
  // Predicated region
  $region6: #{basic_block_forward.1} parent=0 // pred_check
    _
  $region7: #{basic_block_forward.1} parent=0 // pred_check_branch
    %15 = sbr.rel (0) target = $region9
  $region8: #{basic_block_forward.1} parent=0 // pred_region
    _
  $region9: #{basic_block_forward.1} parent=0 // pred_fallthru
    _
  // Predicated region
  $region10: #{basic_block_forward.1} parent=0 // pred_check
    _
  $region11: #{basic_block_forward.1} parent=0 // pred_check_branch
    %17 = sbr.rel (0) target = $region13
  $region12: #{basic_block_forward.1} parent=0 // pred_region
    _
  $region13: #{basic_block_forward.1} parent=0 // pred_fallthru
    _
  // Predicated region
  $region14: #{basic_block_forward.1} parent=0 // pred_check
    _
  $region15: #{basic_block_forward.1} parent=0 // pred_check_branch
    %19 = sbr.rel (0) target = $region17
  $region16: #{basic_block_forward.1} parent=0 // pred_region
    _
  $region17: #{basic_block_forward.1} parent=0 // pred_fallthru
    _
  // Predicated region
  $region18: #{basic_block_forward.1} parent=0 // pred_check
    _
  $region19: #{basic_block_forward.1} parent=0 // pred_check_branch
    %21 = sbr.rel (0) target = $region21
  $region20: #{basic_block_forward.1} parent=0 // pred_region
    _
  $region21: #{basic_block_forward.1} parent=0 // pred_fallthru
    _
  // Predicated region
  $region22: #{basic_block_forward.1} parent=0 // pred_check
    _
  $region23: #{basic_block_forward.1} parent=0 // pred_check_branch
    %23 = sbr.rel (0) target = $region25
  $region24: #{basic_block_forward.1} parent=0 // pred_region
    _
  $region25: #{basic_block_forward.1} parent=0 // pred_fallthru
    _
  // Predicated region
  $region26: #{basic_block_forward.1} parent=0 // pred_check
    _
  $region27: #{basic_block_forward.1} parent=0 // pred_check_branch
    %25 = sbr.rel (0) target = $region29
  $region28: #{basic_block_forward.1} parent=0 // pred_region
    _
  $region29: #{basic_block_forward.1} parent=0 // pred_fallthru
    _
  %v27 = vld [vmem:[%s0] sm:$0xff]
  %v28 = vld [vmem:[%s0 + $0x8] sm:$0xff]
  %v29 = vld [vmem:[%s0 + $0x10] sm:$0xff]
  %v30 = vld [vmem:[%s0 + $0x18] sm:$0xff]
  %vm36 = vcmask 1040384
  %v37 = vrot.slane 0.0, 7
  %v38 = vrot.slane %v27, 7
  %v39 = vsel %vm36, %v37, %v38
  %v40 = vrot.slane %v28, 7
  %v41 = vsel %vm36, %v38, %v40
  %v42 = vrot.slane %v29, 7
  %v43 = vsel %vm36, %v37, %v42
  %v44 = vrot.slane %v30, 7
  %v45 = vsel %vm36, %v42, %v44
  %v50 = vpack.c.bf16 %v41, %v39
  %v51 = vpack.c.bf16 %v45, %v43
  %v52 = vpack.c.bf16 %v28, %v27
  %v53 = vpack.c.bf16 %v30, %v29
  %vm54 = vcmask 1046528
  %v55 = vrot.slane %v27, 1
  %v56 = vrot.slane %v28, 1
  %v57 = vsel %vm54, %v55, %v56
  %v58 = vrot.slane 0.0, 1
  %v59 = vsel %vm54, %v56, %v58
  %v60 = vrot.slane %v29, 1
  %v61 = vrot.slane %v30, 1
  %v62 = vsel %vm54, %v60, %v61
  %v63 = vsel %vm54, %v61, %v58
  %v68 = vpack.c.bf16 %v59, %v57
  %v69 = vpack.c.bf16 %v63, %v62
  %v70 = vld [vmem:[%s1] sm:$0xf]
  %v71 = vld [vmem:[%s1 + $0x4] sm:$0xf]
  %v72 = vld [vmem:[%s1 + $0x8] sm:$0xf]
  %v73 = vld [vmem:[%s1 + $0xc] sm:$0xf]
  %v74 = vld [vmem:[%s1 + $0x10] sm:$0xf]
  %v75 = vld [vmem:[%s1 + $0x14] sm:$0xf]
  %v76 = vld [vmem:[%s1 + $0x18] sm:$0xf]
  %v77 = vld [vmem:[%s1 + $0x1c] sm:$0xf]
  %v78 = vld [vmem:[%s1 + $0x20] sm:$0xf]
  %v79 = vld [vmem:[%s1 + $0x24] sm:$0xf]
  %v80 = vld [vmem:[%s1 + $0x28] sm:$0xf]
  %v81 = vld [vmem:[%s1 + $0x2c] sm:$0xf]
  %v82 = vld [vmem:[%s1 + $0x30] sm:$0xf]
  %v83 = vld [vmem:[%s1 + $0x34] sm:$0xf]
  %v84 = vld [vmem:[%s1 + $0x38] sm:$0xf]
  %v85 = vld [vmem:[%s1 + $0x3c] sm:$0xf]
  %s86 = scalar_lea.vmem %s1, 64
  %v87 = vld [vmem:[%s86] sm:$0xf]
  %v88 = vld [vmem:[%s86 + $0x4] sm:$0xf]
  %v89 = vld [vmem:[%s86 + $0x8] sm:$0xf]
  %v90 = vld [vmem:[%s86 + $0xc] sm:$0xf]
  %v91 = vld [vmem:[%s86 + $0x10] sm:$0xf]
  %v92 = vld [vmem:[%s86 + $0x14] sm:$0xf]
  %v93 = vld [vmem:[%s86 + $0x18] sm:$0xf]
  %v94 = vld [vmem:[%s86 + $0x1c] sm:$0xf]
  %v95 = vld [vmem:[%s86 + $0x20] sm:$0xf]
  %v96 = vld [vmem:[%s86 + $0x24] sm:$0xf]
  %v97 = vld [vmem:[%s86 + $0x28] sm:$0xf]
  %v98 = vld [vmem:[%s86 + $0x2c] sm:$0xf]
  %v99 = vld [vmem:[%s86 + $0x30] sm:$0xf]
  %v100 = vld [vmem:[%s86 + $0x34] sm:$0xf]
  %v101 = vld [vmem:[%s86 + $0x38] sm:$0xf]
  %v102 = vld [vmem:[%s86 + $0x3c] sm:$0xf]
  %v119 = vunpack.c.l.b16 %v87
  %v120 = vunpack.c.l.b16 %v88
  %v121 = vunpack.c.l.b16 %v89
  %v122 = vunpack.c.l.b16 %v90
  %v123 = vunpack.c.l.b16 %v91
  %v124 = vunpack.c.l.b16 %v92
  %v125 = vunpack.c.l.b16 %v93
  %v126 = vunpack.c.l.b16 %v94
  %v127 = vunpack.c.l.b16 %v95
  %v128 = vunpack.c.l.b16 %v96
  %v129 = vunpack.c.l.b16 %v97
  %v130 = vunpack.c.l.b16 %v98
  %v131 = vunpack.c.l.b16 %v99
  %v132 = vunpack.c.l.b16 %v100
  %v133 = vunpack.c.l.b16 %v101
  %v134 = vunpack.c.l.b16 %v102
  %v135 = vpack.c.b16 %v120, %v119
  %v136 = vpack.c.b16 %v122, %v121
  %v137 = vpack.c.b16 %v124, %v123
  %v138 = vpack.c.b16 %v126, %v125
  %v139 = vpack.c.b16 %v128, %v127
  %v140 = vpack.c.b16 %v130, %v129
  %v141 = vpack.c.b16 %v132, %v131
  %v142 = vpack.c.b16 %v134, %v133
  %151 = vmatprep.subr.bf16.mxu0 0
  %152 = vmatpush1.bf16.msra.mxu0 %v135
  %153 = vmatprep.subr.bf16.mxu0 0
  %154 = vmatpush1.bf16.msra.mxu0 %v136
  %155 = vmatprep.subr.bf16.mxu0 0
  %156 = vmatpush1.bf16.msra.mxu0 %v137
  %157 = vmatprep.subr.bf16.mxu0 0
  %158 = vmatpush1.bf16.msra.mxu0 %v138
  %159 = vmatprep.subr.bf16.mxu0 0
  %160 = vmatpush1.bf16.msra.mxu0 %v139
  %161 = vmatprep.subr.bf16.mxu0 0
  %162 = vmatpush1.bf16.msra.mxu0 %v140
  %163 = vmatprep.subr.bf16.mxu0 0
  %164 = vmatpush1.bf16.msra.mxu0 %v141
  %165 = vmatprep.subr.bf16.mxu0 0
  %166 = vmatpush1.bf16.msra.mxu0 %v142
  %167 = vmatprep.subr.bf16.mxu0 0
  %168 = vmatpush1.bf16.msra.mxu0 0
  %169 = vmatprep.subr.bf16.mxu0 0
  %170 = vmatpush1.bf16.msra.mxu0 0
  %171 = vmatprep.subr.bf16.mxu0 0
  %172 = vmatpush1.bf16.msra.mxu0 0
  %173 = vmatprep.subr.bf16.mxu0 0
  %174 = vmatpush1.bf16.msra.mxu0 0
  %175 = vmatprep.subr.bf16.mxu0 0
  %176 = vmatpush1.bf16.msra.mxu0 0
  %177 = vmatprep.subr.bf16.mxu0 0
  %178 = vmatpush1.bf16.msra.mxu0 0
  %179 = vmatprep.subr.bf16.mxu0 0
  %180 = vmatpush1.bf16.msra.mxu0 0
  %181 = vmatprep.subr.bf16.mxu0 0
  %182 = vmatpush1.bf16.msra.mxu0 0
  %183 = vmatprep.mubr.bf16.mxu0 0
  %184 = vmatmul.mubr.bf16.gmra.mrb[0].mxu0 %v52
  %v185 = vpop.f32.mrb[0].mxu0
  %v186 = vadd.f32 0.0, %v185
  %v187 = vpop.f32.mrb[0].mxu0
  %v188 = vpop.f32.mrb[0].mxu0
  %v189 = vadd.f32 0.0, %v188
  %v190 = vpop.f32.mrb[0].mxu0
  %191 = vmatprep.mubr.bf16.mxu0 0
  %192 = vmatmul.mubr.bf16.gmra.mrb[0].mxu0 %v53
  %v193 = vpop.f32.mrb[0].mxu0
  %v194 = vadd.f32 0.0, %v193
  %v195 = vpop.f32.mrb[0].mxu0
  %v196 = vpop.f32.mrb[0].mxu0
  %v197 = vadd.f32 0.0, %v196
  %v198 = vpop.f32.mrb[0].mxu0
  %199 = vdwg.mxu0
  %v216 = vunpack.c.l.b16 %v70
  %v217 = vunpack.c.l.b16 %v71
  %v218 = vunpack.c.l.b16 %v72
  %v219 = vunpack.c.l.b16 %v73
  %v220 = vunpack.c.l.b16 %v74
  %v221 = vunpack.c.l.b16 %v75
  %v222 = vunpack.c.l.b16 %v76
  %v223 = vunpack.c.l.b16 %v77
  %v224 = vunpack.c.l.b16 %v78
  %v225 = vunpack.c.l.b16 %v79
  %v226 = vunpack.c.l.b16 %v80
  %v227 = vunpack.c.l.b16 %v81
  %v228 = vunpack.c.l.b16 %v82
  %v229 = vunpack.c.l.b16 %v83
  %v230 = vunpack.c.l.b16 %v84
  %v231 = vunpack.c.l.b16 %v85
  %v232 = vpack.c.b16 %v217, %v216
  %v233 = vpack.c.b16 %v219, %v218
  %v234 = vpack.c.b16 %v221, %v220
  %v235 = vpack.c.b16 %v223, %v222
  %v236 = vpack.c.b16 %v225, %v224
  %v237 = vpack.c.b16 %v227, %v226
  %v238 = vpack.c.b16 %v229, %v228
  %v239 = vpack.c.b16 %v231, %v230
  %248 = vmatprep.subr.bf16.mxu0 0
  %249 = vmatpush1.bf16.msra.mxu0 %v232
  %250 = vmatprep.subr.bf16.mxu0 0
  %251 = vmatpush1.bf16.msra.mxu0 %v233
  %252 = vmatprep.subr.bf16.mxu0 0
  %253 = vmatpush1.bf16.msra.mxu0 %v234
  %254 = vmatprep.subr.bf16.mxu0 0
  %255 = vmatpush1.bf16.msra.mxu0 %v235
  %256 = vmatprep.subr.bf16.mxu0 0
  %257 = vmatpush1.bf16.msra.mxu0 %v236
  %258 = vmatprep.subr.bf16.mxu0 0
  %259 = vmatpush1.bf16.msra.mxu0 %v237
  %260 = vmatprep.subr.bf16.mxu0 0
  %261 = vmatpush1.bf16.msra.mxu0 %v238
  %262 = vmatprep.subr.bf16.mxu0 0
  %263 = vmatpush1.bf16.msra.mxu0 %v239
  %264 = vmatprep.subr.bf16.mxu0 0
  %265 = vmatpush1.bf16.msra.mxu0 0
  %266 = vmatprep.subr.bf16.mxu0 0
  %267 = vmatpush1.bf16.msra.mxu0 0
  %268 = vmatprep.subr.bf16.mxu0 0
  %269 = vmatpush1.bf16.msra.mxu0 0
  %270 = vmatprep.subr.bf16.mxu0 0
  %271 = vmatpush1.bf16.msra.mxu0 0
  %272 = vmatprep.subr.bf16.mxu0 0
  %273 = vmatpush1.bf16.msra.mxu0 0
  %274 = vmatprep.subr.bf16.mxu0 0
  %275 = vmatpush1.bf16.msra.mxu0 0
  %276 = vmatprep.subr.bf16.mxu0 0
  %277 = vmatpush1.bf16.msra.mxu0 0
  %278 = vmatprep.subr.bf16.mxu0 0
  %279 = vmatpush1.bf16.msra.mxu0 0
  %280 = vmatprep.mubr.bf16.mxu0 0
  %281 = vmatmul.mubr.bf16.gmra.mrb[0].mxu0 %v50
  %v282 = vpop.f32.mrb[0].mxu0
  %v283 = vadd.f32 %v186, %v282
  %v284 = vpop.f32.mrb[0].mxu0
  %v285 = vpop.f32.mrb[0].mxu0
  %v286 = vadd.f32 %v189, %v285
  %v287 = vpop.f32.mrb[0].mxu0
  %288 = vmatprep.mubr.bf16.mxu0 0
  %289 = vmatmul.mubr.bf16.gmra.mrb[0].mxu0 %v51
  %v290 = vpop.f32.mrb[0].mxu0
  %v291 = vadd.f32 %v194, %v290
  %v292 = vpop.f32.mrb[0].mxu0
  %v293 = vpop.f32.mrb[0].mxu0
  %v294 = vadd.f32 %v197, %v293
  %v295 = vpop.f32.mrb[0].mxu0
  %296 = vdwg.mxu0
  %s297 = scalar_lea.vmem %s1, 128
  %v298 = vld [vmem:[%s297] sm:$0xf]
  %v299 = vld [vmem:[%s297 + $0x4] sm:$0xf]
  %v300 = vld [vmem:[%s297 + $0x8] sm:$0xf]
  %v301 = vld [vmem:[%s297 + $0xc] sm:$0xf]
  %v302 = vld [vmem:[%s297 + $0x10] sm:$0xf]
  %v303 = vld [vmem:[%s297 + $0x14] sm:$0xf]
  %v304 = vld [vmem:[%s297 + $0x18] sm:$0xf]
  %v305 = vld [vmem:[%s297 + $0x1c] sm:$0xf]
  %v306 = vld [vmem:[%s297 + $0x20] sm:$0xf]
  %v307 = vld [vmem:[%s297 + $0x24] sm:$0xf]
  %v308 = vld [vmem:[%s297 + $0x28] sm:$0xf]
  %v309 = vld [vmem:[%s297 + $0x2c] sm:$0xf]
  %v310 = vld [vmem:[%s297 + $0x30] sm:$0xf]
  %v311 = vld [vmem:[%s297 + $0x34] sm:$0xf]
  %v312 = vld [vmem:[%s297 + $0x38] sm:$0xf]
  %v313 = vld [vmem:[%s297 + $0x3c] sm:$0xf]
  %v330 = vunpack.c.l.b16 %v298
  %v331 = vunpack.c.l.b16 %v299
  %v332 = vunpack.c.l.b16 %v300
  %v333 = vunpack.c.l.b16 %v301
  %v334 = vunpack.c.l.b16 %v302
  %v335 = vunpack.c.l.b16 %v303
  %v336 = vunpack.c.l.b16 %v304
  %v337 = vunpack.c.l.b16 %v305
  %v338 = vunpack.c.l.b16 %v306
  %v339 = vunpack.c.l.b16 %v307
  %v340 = vunpack.c.l.b16 %v308
  %v341 = vunpack.c.l.b16 %v309
  %v342 = vunpack.c.l.b16 %v310
  %v343 = vunpack.c.l.b16 %v311
  %v344 = vunpack.c.l.b16 %v312
  %v345 = vunpack.c.l.b16 %v313
  %v346 = vpack.c.b16 %v331, %v330
  %v347 = vpack.c.b16 %v333, %v332
  %v348 = vpack.c.b16 %v335, %v334
  %v349 = vpack.c.b16 %v337, %v336
  %v350 = vpack.c.b16 %v339, %v338
  %v351 = vpack.c.b16 %v341, %v340
  %v352 = vpack.c.b16 %v343, %v342
  %v353 = vpack.c.b16 %v345, %v344
  %362 = vmatprep.subr.bf16.mxu0 0
  %363 = vmatpush1.bf16.msra.mxu0 %v346
  %364 = vmatprep.subr.bf16.mxu0 0
  %365 = vmatpush1.bf16.msra.mxu0 %v347
  %366 = vmatprep.subr.bf16.mxu0 0
  %367 = vmatpush1.bf16.msra.mxu0 %v348
  %368 = vmatprep.subr.bf16.mxu0 0
  %369 = vmatpush1.bf16.msra.mxu0 %v349
  %370 = vmatprep.subr.bf16.mxu0 0
  %371 = vmatpush1.bf16.msra.mxu0 %v350
  %372 = vmatprep.subr.bf16.mxu0 0
  %373 = vmatpush1.bf16.msra.mxu0 %v351
  %374 = vmatprep.subr.bf16.mxu0 0
  %375 = vmatpush1.bf16.msra.mxu0 %v352
  %376 = vmatprep.subr.bf16.mxu0 0
  %377 = vmatpush1.bf16.msra.mxu0 %v353
  %378 = vmatprep.subr.bf16.mxu0 0
  %379 = vmatpush1.bf16.msra.mxu0 0
  %380 = vmatprep.subr.bf16.mxu0 0
  %381 = vmatpush1.bf16.msra.mxu0 0
  %382 = vmatprep.subr.bf16.mxu0 0
  %383 = vmatpush1.bf16.msra.mxu0 0
  %384 = vmatprep.subr.bf16.mxu0 0
  %385 = vmatpush1.bf16.msra.mxu0 0
  %386 = vmatprep.subr.bf16.mxu0 0
  %387 = vmatpush1.bf16.msra.mxu0 0
  %388 = vmatprep.subr.bf16.mxu0 0
  %389 = vmatpush1.bf16.msra.mxu0 0
  %390 = vmatprep.subr.bf16.mxu0 0
  %391 = vmatpush1.bf16.msra.mxu0 0
  %392 = vmatprep.subr.bf16.mxu0 0
  %393 = vmatpush1.bf16.msra.mxu0 0
  %394 = vmatprep.mubr.bf16.mxu0 0
  %395 = vmatmul.mubr.bf16.gmra.mrb[0].mxu0 %v68
  %v396 = vpop.f32.mrb[0].mxu0
  %v397 = vadd.f32 0.0, %v396
  %v398 = vpop.f32.mrb[0].mxu0
  %v399 = vpop.f32.mrb[0].mxu0
  %v400 = vadd.f32 0.0, %v399
  %v401 = vpop.f32.mrb[0].mxu0
  %402 = vmatprep.mubr.bf16.mxu0 0
  %403 = vmatmul.mubr.bf16.gmra.mrb[0].mxu0 %v69
  %v404 = vpop.f32.mrb[0].mxu0
  %v405 = vadd.f32 0.0, %v404
  %v406 = vpop.f32.mrb[0].mxu0
  %v407 = vpop.f32.mrb[0].mxu0
  %v408 = vadd.f32 0.0, %v407
  %v409 = vpop.f32.mrb[0].mxu0
  %410 = vdwg.mxu0
  %v411 = vadd.f32 %v283, %v397
  %v412 = vadd.f32 %v286, %v400
  %v413 = vadd.f32 %v291, %v405
  %v414 = vadd.f32 %v294, %v408
  %v415 = vld [vmem:[%s2] sm:$0x1]
  %v416 = vld [vmem:[%s3] sm:$0x1]
  %v417 = vadd.f32 %v411, %v412
  %v418 = vadd.f32 %v417, %v413
  %v419 = vadd.f32 %v418, %v414
  %v420 = vrot.slane %v419, 4
  %v421 = vadd.f32 %v419, %v420
  %v422 = vrot.slane %v421, 2
  %v423 = vadd.f32 %v421, %v422
  %v424 = vrot.slane %v423, 1
  %v425 = vadd.f32 %v423, %v424
  %426 = vrot.lane.b32.xlu0 %v425, 8
  %v427 = vpop.permute.xlu0 %426
  %v428 = vadd.f32 %v425, %v427
  %429 = vrot.lane.b32.xlu0 %v428, 16
  %v430 = vpop.permute.xlu0 %429
  %v431 = vadd.f32 %v428, %v430
  %432 = vrot.lane.b32.xlu0 %v431, 32
  %v433 = vpop.permute.xlu0 %432
  %v434 = vadd.f32 %v431, %v433
  %435 = vrot.lane.b32.xlu0 %v434, 64
  %v436 = vpop.permute.xlu0 %435
  %v437 = vadd.f32 %v434, %v436
  %v438 = vmul.f32 %v437, 0.001953125
  %v439 = vlaneseq
  %v440 = vshrl.u32 %v439, 7
  %v441 = vsub.s32 0, %v440
  %v442 = vrot.slane %v438, %v441
  %v443 = vsub.f32 %v411, %v442
  %v444 = vsub.f32 %v412, %v442
  %v445 = vsub.f32 %v413, %v442
  %v446 = vsub.f32 %v414, %v442
  %v447 = vmul.f32 %v443, %v443
  %v448 = vmul.f32 %v444, %v444
  %v449 = vmul.f32 %v445, %v445
  %v450 = vmul.f32 %v446, %v446
  %v451 = vadd.f32 %v447, %v448
  %v452 = vadd.f32 %v451, %v449
  %v453 = vadd.f32 %v452, %v450
  %v454 = vrot.slane %v453, 4
  %v455 = vadd.f32 %v453, %v454
  %v456 = vrot.slane %v455, 2
  %v457 = vadd.f32 %v455, %v456
  %v458 = vrot.slane %v457, 1
  %v459 = vadd.f32 %v457, %v458
  %460 = vrot.lane.b32.xlu0 %v459, 8
  %v461 = vpop.permute.xlu0 %460
  %v462 = vadd.f32 %v459, %v461
  %463 = vrot.lane.b32.xlu0 %v462, 16
  %v464 = vpop.permute.xlu0 %463
  %v465 = vadd.f32 %v462, %v464
  %466 = vrot.lane.b32.xlu0 %v465, 32
  %v467 = vpop.permute.xlu0 %466
  %v468 = vadd.f32 %v465, %v467
  %469 = vrot.lane.b32.xlu0 %v468, 64
  %v470 = vpop.permute.xlu0 %469
  %v471 = vadd.f32 %v468, %v470
  %v472 = vmul.f32 %v471, 0.001953125
  %v473 = vadd.f32 %v472, 1e-05
  %v474 = vrsqrt.pop %v473
  %v475 = vlaneseq
  %v476 = vshrl.u32 %v475, 7
  %v477 = vsub.s32 0, %v476
  %v478 = vrot.slane %v474, %v477
  %v479 = vmul.f32 %v443, %v478
  %v480 = vmul.f32 %v444, %v478
  %v481 = vmul.f32 %v445, %v478
  %v482 = vmul.f32 %v446, %v478
  %v484 = vlaneseq
  %v485 = vshrl.u32 %v484, 7
  %v486 = vsub.s32 0, %v485
  %v487 = vrot.slane %v415, %v486
  %v489 = vmul.f32 %v479, %v487
  %v490 = vmul.f32 %v480, %v487
  %v491 = vmul.f32 %v481, %v487
  %v492 = vmul.f32 %v482, %v487
  %v494 = vlaneseq
  %v495 = vshrl.u32 %v494, 7
  %v496 = vsub.s32 0, %v495
  %v497 = vrot.slane %v416, %v496
  %v499 = vadd.f32 %v489, %v497
  %v500 = vadd.f32 %v490, %v497
  %v501 = vadd.f32 %v491, %v497
  %v502 = vadd.f32 %v492, %v497
  %v503 = vmax.f32 %v499, 0.0
  %v504 = vmax.f32 %v500, 0.0
  %v505 = vmax.f32 %v501, 0.0
  %v506 = vmax.f32 %v502, 0.0
  %v511 = vrot.slane %v503, 7
  %v512 = vsel %vm36, %v37, %v511
  %v513 = vrot.slane %v504, 7
  %v514 = vsel %vm36, %v511, %v513
  %v515 = vrot.slane %v505, 7
  %v516 = vsel %vm36, %v37, %v515
  %v517 = vrot.slane %v506, 7
  %v518 = vsel %vm36, %v515, %v517
  %v523 = vpack.c.bf16 %v514, %v512
  %v524 = vpack.c.bf16 %v518, %v516
  %v525 = vpack.c.bf16 %v504, %v503
  %v526 = vpack.c.bf16 %v506, %v505
  %v527 = vrot.slane %v503, 1
  %v528 = vrot.slane %v504, 1
  %v529 = vsel %vm54, %v527, %v528
  %v530 = vsel %vm54, %v528, %v58
  %v531 = vrot.slane %v505, 1
  %v532 = vrot.slane %v506, 1
  %v533 = vsel %vm54, %v531, %v532
  %v534 = vsel %vm54, %v532, %v58
  %v539 = vpack.c.bf16 %v530, %v529
  %v540 = vpack.c.bf16 %v534, %v533
  %v541 = vld [vmem:[%s4] sm:$0xf]
  %v542 = vld [vmem:[%s4 + $0x4] sm:$0xf]
  %v543 = vld [vmem:[%s4 + $0x8] sm:$0xf]
  %v544 = vld [vmem:[%s4 + $0xc] sm:$0xf]
  %v545 = vld [vmem:[%s4 + $0x10] sm:$0xf]
  %v546 = vld [vmem:[%s4 + $0x14] sm:$0xf]
  %v547 = vld [vmem:[%s4 + $0x18] sm:$0xf]
  %v548 = vld [vmem:[%s4 + $0x1c] sm:$0xf]
  %v549 = vld [vmem:[%s4 + $0x20] sm:$0xf]
  %v550 = vld [vmem:[%s4 + $0x24] sm:$0xf]
  %v551 = vld [vmem:[%s4 + $0x28] sm:$0xf]
  %v552 = vld [vmem:[%s4 + $0x2c] sm:$0xf]
  %v553 = vld [vmem:[%s4 + $0x30] sm:$0xf]
  %v554 = vld [vmem:[%s4 + $0x34] sm:$0xf]
  %v555 = vld [vmem:[%s4 + $0x38] sm:$0xf]
  %v556 = vld [vmem:[%s4 + $0x3c] sm:$0xf]
  %s557 = scalar_lea.vmem %s4, 64
  %v558 = vld [vmem:[%s557] sm:$0xf]
  %v559 = vld [vmem:[%s557 + $0x4] sm:$0xf]
  %v560 = vld [vmem:[%s557 + $0x8] sm:$0xf]
  %v561 = vld [vmem:[%s557 + $0xc] sm:$0xf]
  %v562 = vld [vmem:[%s557 + $0x10] sm:$0xf]
  %v563 = vld [vmem:[%s557 + $0x14] sm:$0xf]
  %v564 = vld [vmem:[%s557 + $0x18] sm:$0xf]
  %v565 = vld [vmem:[%s557 + $0x1c] sm:$0xf]
  %v566 = vld [vmem:[%s557 + $0x20] sm:$0xf]
  %v567 = vld [vmem:[%s557 + $0x24] sm:$0xf]
  %v568 = vld [vmem:[%s557 + $0x28] sm:$0xf]
  %v569 = vld [vmem:[%s557 + $0x2c] sm:$0xf]
  %v570 = vld [vmem:[%s557 + $0x30] sm:$0xf]
  %v571 = vld [vmem:[%s557 + $0x34] sm:$0xf]
  %v572 = vld [vmem:[%s557 + $0x38] sm:$0xf]
  %v573 = vld [vmem:[%s557 + $0x3c] sm:$0xf]
  %v590 = vunpack.c.l.b16 %v558
  %v591 = vunpack.c.l.b16 %v559
  %v592 = vunpack.c.l.b16 %v560
  %v593 = vunpack.c.l.b16 %v561
  %v594 = vunpack.c.l.b16 %v562
  %v595 = vunpack.c.l.b16 %v563
  %v596 = vunpack.c.l.b16 %v564
  %v597 = vunpack.c.l.b16 %v565
  %v598 = vunpack.c.l.b16 %v566
  %v599 = vunpack.c.l.b16 %v567
  %v600 = vunpack.c.l.b16 %v568
  %v601 = vunpack.c.l.b16 %v569
  %v602 = vunpack.c.l.b16 %v570
  %v603 = vunpack.c.l.b16 %v571
  %v604 = vunpack.c.l.b16 %v572
  %v605 = vunpack.c.l.b16 %v573
  %v606 = vpack.c.b16 %v591, %v590
  %v607 = vpack.c.b16 %v593, %v592
  %v608 = vpack.c.b16 %v595, %v594
  %v609 = vpack.c.b16 %v597, %v596
  %v610 = vpack.c.b16 %v599, %v598
  %v611 = vpack.c.b16 %v601, %v600
  %v612 = vpack.c.b16 %v603, %v602
  %v613 = vpack.c.b16 %v605, %v604
  %622 = vmatprep.subr.bf16.mxu0 0
  %623 = vmatpush1.bf16.msra.mxu0 %v606
  %624 = vmatprep.subr.bf16.mxu0 0
  %625 = vmatpush1.bf16.msra.mxu0 %v607
  %626 = vmatprep.subr.bf16.mxu0 0
  %627 = vmatpush1.bf16.msra.mxu0 %v608
  %628 = vmatprep.subr.bf16.mxu0 0
  %629 = vmatpush1.bf16.msra.mxu0 %v609
  %630 = vmatprep.subr.bf16.mxu0 0
  %631 = vmatpush1.bf16.msra.mxu0 %v610
  %632 = vmatprep.subr.bf16.mxu0 0
  %633 = vmatpush1.bf16.msra.mxu0 %v611
  %634 = vmatprep.subr.bf16.mxu0 0
  %635 = vmatpush1.bf16.msra.mxu0 %v612
  %636 = vmatprep.subr.bf16.mxu0 0
  %637 = vmatpush1.bf16.msra.mxu0 %v613
  %638 = vmatprep.subr.bf16.mxu0 0
  %639 = vmatpush1.bf16.msra.mxu0 0
  %640 = vmatprep.subr.bf16.mxu0 0
  %641 = vmatpush1.bf16.msra.mxu0 0
  %642 = vmatprep.subr.bf16.mxu0 0
  %643 = vmatpush1.bf16.msra.mxu0 0
  %644 = vmatprep.subr.bf16.mxu0 0
  %645 = vmatpush1.bf16.msra.mxu0 0
  %646 = vmatprep.subr.bf16.mxu0 0
  %647 = vmatpush1.bf16.msra.mxu0 0
  %648 = vmatprep.subr.bf16.mxu0 0
  %649 = vmatpush1.bf16.msra.mxu0 0
  %650 = vmatprep.subr.bf16.mxu0 0
  %651 = vmatpush1.bf16.msra.mxu0 0
  %652 = vmatprep.subr.bf16.mxu0 0
  %653 = vmatpush1.bf16.msra.mxu0 0
  %654 = vmatprep.mubr.bf16.mxu0 0
  %655 = vmatmul.mubr.bf16.gmra.mrb[0].mxu0 %v525
  %v656 = vpop.f32.mrb[0].mxu0
  %v657 = vadd.f32 0.0, %v656
  %v658 = vpop.f32.mrb[0].mxu0
  %v659 = vpop.f32.mrb[0].mxu0
  %v660 = vadd.f32 0.0, %v659
  %v661 = vpop.f32.mrb[0].mxu0
  %662 = vmatprep.mubr.bf16.mxu0 0
  %663 = vmatmul.mubr.bf16.gmra.mrb[0].mxu0 %v526
  %v664 = vpop.f32.mrb[0].mxu0
  %v665 = vadd.f32 0.0, %v664
  %v666 = vpop.f32.mrb[0].mxu0
  %v667 = vpop.f32.mrb[0].mxu0
  %v668 = vadd.f32 0.0, %v667
  %v669 = vpop.f32.mrb[0].mxu0
  %670 = vdwg.mxu0
  %v687 = vunpack.c.l.b16 %v541
  %v688 = vunpack.c.l.b16 %v542
  %v689 = vunpack.c.l.b16 %v543
  %v690 = vunpack.c.l.b16 %v544
  %v691 = vunpack.c.l.b16 %v545
  %v692 = vunpack.c.l.b16 %v546
  %v693 = vunpack.c.l.b16 %v547
  %v694 = vunpack.c.l.b16 %v548
  %v695 = vunpack.c.l.b16 %v549
  %v696 = vunpack.c.l.b16 %v550
  %v697 = vunpack.c.l.b16 %v551
  %v698 = vunpack.c.l.b16 %v552
  %v699 = vunpack.c.l.b16 %v553
  %v700 = vunpack.c.l.b16 %v554
  %v701 = vunpack.c.l.b16 %v555
  %v702 = vunpack.c.l.b16 %v556
  %v703 = vpack.c.b16 %v688, %v687
  %v704 = vpack.c.b16 %v690, %v689
  %v705 = vpack.c.b16 %v692, %v691
  %v706 = vpack.c.b16 %v694, %v693
  %v707 = vpack.c.b16 %v696, %v695
  %v708 = vpack.c.b16 %v698, %v697
  %v709 = vpack.c.b16 %v700, %v699
  %v710 = vpack.c.b16 %v702, %v701
  %719 = vmatprep.subr.bf16.mxu0 0
  %720 = vmatpush1.bf16.msra.mxu0 %v703
  %721 = vmatprep.subr.bf16.mxu0 0
  %722 = vmatpush1.bf16.msra.mxu0 %v704
  %723 = vmatprep.subr.bf16.mxu0 0
  %724 = vmatpush1.bf16.msra.mxu0 %v705
  %725 = vmatprep.subr.bf16.mxu0 0
  %726 = vmatpush1.bf16.msra.mxu0 %v706
  %727 = vmatprep.subr.bf16.mxu0 0
  %728 = vmatpush1.bf16.msra.mxu0 %v707
  %729 = vmatprep.subr.bf16.mxu0 0
  %730 = vmatpush1.bf16.msra.mxu0 %v708
  %731 = vmatprep.subr.bf16.mxu0 0
  %732 = vmatpush1.bf16.msra.mxu0 %v709
  %733 = vmatprep.subr.bf16.mxu0 0
  %734 = vmatpush1.bf16.msra.mxu0 %v710
  %735 = vmatprep.subr.bf16.mxu0 0
  %736 = vmatpush1.bf16.msra.mxu0 0
  %737 = vmatprep.subr.bf16.mxu0 0
  %738 = vmatpush1.bf16.msra.mxu0 0
  %739 = vmatprep.subr.bf16.mxu0 0
  %740 = vmatpush1.bf16.msra.mxu0 0
  %741 = vmatprep.subr.bf16.mxu0 0
  %742 = vmatpush1.bf16.msra.mxu0 0
  %743 = vmatprep.subr.bf16.mxu0 0
  %744 = vmatpush1.bf16.msra.mxu0 0
  %745 = vmatprep.subr.bf16.mxu0 0
  %746 = vmatpush1.bf16.msra.mxu0 0
  %747 = vmatprep.subr.bf16.mxu0 0
  %748 = vmatpush1.bf16.msra.mxu0 0
  %749 = vmatprep.subr.bf16.mxu0 0
  %750 = vmatpush1.bf16.msra.mxu0 0
  %751 = vmatprep.mubr.bf16.mxu0 0
  %752 = vmatmul.mubr.bf16.gmra.mrb[0].mxu0 %v523
  %v753 = vpop.f32.mrb[0].mxu0
  %v754 = vadd.f32 %v657, %v753
  %v755 = vpop.f32.mrb[0].mxu0
  %v756 = vpop.f32.mrb[0].mxu0
  %v757 = vadd.f32 %v660, %v756
  %v758 = vpop.f32.mrb[0].mxu0
  %759 = vmatprep.mubr.bf16.mxu0 0
  %760 = vmatmul.mubr.bf16.gmra.mrb[0].mxu0 %v524
  %v761 = vpop.f32.mrb[0].mxu0
  %v762 = vadd.f32 %v665, %v761
  %v763 = vpop.f32.mrb[0].mxu0
  %v764 = vpop.f32.mrb[0].mxu0
  %v765 = vadd.f32 %v668, %v764
  %v766 = vpop.f32.mrb[0].mxu0
  %767 = vdwg.mxu0
  %s768 = scalar_lea.vmem %s4, 128
  %v769 = vld [vmem:[%s768] sm:$0xf]
  %v770 = vld [vmem:[%s768 + $0x4] sm:$0xf]
  %v771 = vld [vmem:[%s768 + $0x8] sm:$0xf]
  %v772 = vld [vmem:[%s768 + $0xc] sm:$0xf]
  %v773 = vld [vmem:[%s768 + $0x10] sm:$0xf]
  %v774 = vld [vmem:[%s768 + $0x14] sm:$0xf]
  %v775 = vld [vmem:[%s768 + $0x18] sm:$0xf]
  %v776 = vld [vmem:[%s768 + $0x1c] sm:$0xf]
  %v777 = vld [vmem:[%s768 + $0x20] sm:$0xf]
  %v778 = vld [vmem:[%s768 + $0x24] sm:$0xf]
  %v779 = vld [vmem:[%s768 + $0x28] sm:$0xf]
  %v780 = vld [vmem:[%s768 + $0x2c] sm:$0xf]
  %v781 = vld [vmem:[%s768 + $0x30] sm:$0xf]
  %v782 = vld [vmem:[%s768 + $0x34] sm:$0xf]
  %v783 = vld [vmem:[%s768 + $0x38] sm:$0xf]
  %v784 = vld [vmem:[%s768 + $0x3c] sm:$0xf]
  %v801 = vunpack.c.l.b16 %v769
  %v802 = vunpack.c.l.b16 %v770
  %v803 = vunpack.c.l.b16 %v771
  %v804 = vunpack.c.l.b16 %v772
  %v805 = vunpack.c.l.b16 %v773
  %v806 = vunpack.c.l.b16 %v774
  %v807 = vunpack.c.l.b16 %v775
  %v808 = vunpack.c.l.b16 %v776
  %v809 = vunpack.c.l.b16 %v777
  %v810 = vunpack.c.l.b16 %v778
  %v811 = vunpack.c.l.b16 %v779
  %v812 = vunpack.c.l.b16 %v780
  %v813 = vunpack.c.l.b16 %v781
  %v814 = vunpack.c.l.b16 %v782
  %v815 = vunpack.c.l.b16 %v783
  %v816 = vunpack.c.l.b16 %v784
  %v817 = vpack.c.b16 %v802, %v801
  %v818 = vpack.c.b16 %v804, %v803
  %v819 = vpack.c.b16 %v806, %v805
  %v820 = vpack.c.b16 %v808, %v807
  %v821 = vpack.c.b16 %v810, %v809
  %v822 = vpack.c.b16 %v812, %v811
  %v823 = vpack.c.b16 %v814, %v813
  %v824 = vpack.c.b16 %v816, %v815
  %833 = vmatprep.subr.bf16.mxu0 0
  %834 = vmatpush1.bf16.msra.mxu0 %v817
  %835 = vmatprep.subr.bf16.mxu0 0
  %836 = vmatpush1.bf16.msra.mxu0 %v818
  %837 = vmatprep.subr.bf16.mxu0 0
  %838 = vmatpush1.bf16.msra.mxu0 %v819
  %839 = vmatprep.subr.bf16.mxu0 0
  %840 = vmatpush1.bf16.msra.mxu0 %v820
  %841 = vmatprep.subr.bf16.mxu0 0
  %842 = vmatpush1.bf16.msra.mxu0 %v821
  %843 = vmatprep.subr.bf16.mxu0 0
  %844 = vmatpush1.bf16.msra.mxu0 %v822
  %845 = vmatprep.subr.bf16.mxu0 0
  %846 = vmatpush1.bf16.msra.mxu0 %v823
  %847 = vmatprep.subr.bf16.mxu0 0
  %848 = vmatpush1.bf16.msra.mxu0 %v824
  %849 = vmatprep.subr.bf16.mxu0 0
  %850 = vmatpush1.bf16.msra.mxu0 0
  %851 = vmatprep.subr.bf16.mxu0 0
  %852 = vmatpush1.bf16.msra.mxu0 0
  %853 = vmatprep.subr.bf16.mxu0 0
  %854 = vmatpush1.bf16.msra.mxu0 0
  %855 = vmatprep.subr.bf16.mxu0 0
  %856 = vmatpush1.bf16.msra.mxu0 0
  %857 = vmatprep.subr.bf16.mxu0 0
  %858 = vmatpush1.bf16.msra.mxu0 0
  %859 = vmatprep.subr.bf16.mxu0 0
  %860 = vmatpush1.bf16.msra.mxu0 0
  %861 = vmatprep.subr.bf16.mxu0 0
  %862 = vmatpush1.bf16.msra.mxu0 0
  %863 = vmatprep.subr.bf16.mxu0 0
  %864 = vmatpush1.bf16.msra.mxu0 0
  %865 = vmatprep.mubr.bf16.mxu0 0
  %866 = vmatmul.mubr.bf16.gmra.mrb[0].mxu0 %v539
  %v867 = vpop.f32.mrb[0].mxu0
  %v868 = vadd.f32 0.0, %v867
  %v869 = vpop.f32.mrb[0].mxu0
  %v870 = vpop.f32.mrb[0].mxu0
  %v871 = vadd.f32 0.0, %v870
  %v872 = vpop.f32.mrb[0].mxu0
  %873 = vmatprep.mubr.bf16.mxu0 0
  %874 = vmatmul.mubr.bf16.gmra.mrb[0].mxu0 %v540
  %v875 = vpop.f32.mrb[0].mxu0
  %v876 = vadd.f32 0.0, %v875
  %v877 = vpop.f32.mrb[0].mxu0
  %v878 = vpop.f32.mrb[0].mxu0
  %v879 = vadd.f32 0.0, %v878
  %v880 = vpop.f32.mrb[0].mxu0
  %881 = vdwg.mxu0
  %v882 = vadd.f32 %v754, %v868
  %v883 = vadd.f32 %v757, %v871
  %v884 = vadd.f32 %v762, %v876
  %v885 = vadd.f32 %v765, %v879
  %v886 = vld [vmem:[%s5] sm:$0x1]
  %v887 = vld [vmem:[%s6] sm:$0x1]
  %v888 = vadd.f32 %v882, %v883
  %v889 = vadd.f32 %v888, %v884
  %v890 = vadd.f32 %v889, %v885
  %v891 = vrot.slane %v890, 4
  %v892 = vadd.f32 %v890, %v891
  %v893 = vrot.slane %v892, 2
  %v894 = vadd.f32 %v892, %v893
  %v895 = vrot.slane %v894, 1
  %v896 = vadd.f32 %v894, %v895
  %897 = vrot.lane.b32.xlu0 %v896, 8
  %v898 = vpop.permute.xlu0 %897
  %v899 = vadd.f32 %v896, %v898
  %900 = vrot.lane.b32.xlu0 %v899, 16
  %v901 = vpop.permute.xlu0 %900
  %v902 = vadd.f32 %v899, %v901
  %903 = vrot.lane.b32.xlu0 %v902, 32
  %v904 = vpop.permute.xlu0 %903
  %v905 = vadd.f32 %v902, %v904
  %906 = vrot.lane.b32.xlu0 %v905, 64
  %v907 = vpop.permute.xlu0 %906
  %v908 = vadd.f32 %v905, %v907
  %v909 = vmul.f32 %v908, 0.001953125
  %v910 = vlaneseq
  %v911 = vshrl.u32 %v910, 7
  %v912 = vsub.s32 0, %v911
  %v913 = vrot.slane %v909, %v912
  %v914 = vsub.f32 %v882, %v913
  %v915 = vsub.f32 %v883, %v913
  %v916 = vsub.f32 %v884, %v913
  %v917 = vsub.f32 %v885, %v913
  %v918 = vmul.f32 %v914, %v914
  %v919 = vmul.f32 %v915, %v915
  %v920 = vmul.f32 %v916, %v916
  %v921 = vmul.f32 %v917, %v917
  %v922 = vadd.f32 %v918, %v919
  %v923 = vadd.f32 %v922, %v920
  %v924 = vadd.f32 %v923, %v921
  %v925 = vrot.slane %v924, 4
  %v926 = vadd.f32 %v924, %v925
  %v927 = vrot.slane %v926, 2
  %v928 = vadd.f32 %v926, %v927
  %v929 = vrot.slane %v928, 1
  %v930 = vadd.f32 %v928, %v929
  %931 = vrot.lane.b32.xlu0 %v930, 8
  %v932 = vpop.permute.xlu0 %931
  %v933 = vadd.f32 %v930, %v932
  %934 = vrot.lane.b32.xlu0 %v933, 16
  %v935 = vpop.permute.xlu0 %934
  %v936 = vadd.f32 %v933, %v935
  %937 = vrot.lane.b32.xlu0 %v936, 32
  %v938 = vpop.permute.xlu0 %937
  %v939 = vadd.f32 %v936, %v938
  %940 = vrot.lane.b32.xlu0 %v939, 64
  %v941 = vpop.permute.xlu0 %940
  %v942 = vadd.f32 %v939, %v941
  %v943 = vmul.f32 %v942, 0.001953125
  %v944 = vadd.f32 %v943, 1e-05
  %v945 = vrsqrt.pop %v944
  %v946 = vlaneseq
  %v947 = vshrl.u32 %v946, 7
  %v948 = vsub.s32 0, %v947
  %v949 = vrot.slane %v945, %v948
  %v950 = vmul.f32 %v914, %v949
  %v951 = vmul.f32 %v915, %v949
  %v952 = vmul.f32 %v916, %v949
  %v953 = vmul.f32 %v917, %v949
  %v955 = vlaneseq
  %v956 = vshrl.u32 %v955, 7
  %v957 = vsub.s32 0, %v956
  %v958 = vrot.slane %v886, %v957
  %v960 = vmul.f32 %v950, %v958
  %v961 = vmul.f32 %v951, %v958
  %v962 = vmul.f32 %v952, %v958
  %v963 = vmul.f32 %v953, %v958
  %v965 = vlaneseq
  %v966 = vshrl.u32 %v965, 7
  %v967 = vsub.s32 0, %v966
  %v968 = vrot.slane %v887, %v967
  %v970 = vadd.f32 %v960, %v968
  %v971 = vadd.f32 %v961, %v968
  %v972 = vadd.f32 %v962, %v968
  %v973 = vadd.f32 %v963, %v968
  %v974 = vadd.f32 %v970, %v27
  %v975 = vadd.f32 %v971, %v28
  %v976 = vadd.f32 %v972, %v29
  %v977 = vadd.f32 %v973, %v30
  %v978 = vmax.f32 %v974, 0.0
  %v979 = vmax.f32 %v975, 0.0
  %v980 = vmax.f32 %v976, 0.0
  %v981 = vmax.f32 %v977, 0.0
  %982 = vst [vmem:[%s7] sm:$0xff] %v978
  %983 = vst [vmem:[%s7 + $0x8] sm:$0xff] %v979
  %984 = vst [vmem:[%s7 + $0x10] sm:$0xff] %v980
  %985 = vst [vmem:[%s7 + $0x18] sm:$0xff] %v981
  // Predicated region
  $region30: #{basic_block_forward.1} parent=0 // pred_check
    _
  $region31: #{basic_block_forward.1} parent=0 // pred_check_branch
    %987 = sbr.rel (0) target = $region33
  $region32: #{basic_block_forward.1} parent=0 // pred_region
    _
  $region33: #{basic_block_forward.1} parent=0 // pred_fallthru
    _
  // Predicated region
  $region34: #{basic_block_forward.1} parent=0 // pred_check
    _
  $region35: #{basic_block_forward.1} parent=0 // pred_check_branch
    %989 = sbr.rel (0) target = $region37
  $region36: #{basic_block_forward.1} parent=0 // pred_region
    _
  $region37: #{basic_block_forward.1} parent=0 // pred_fallthru
    _

</llo_original>
